<compile_context>
chip_gen: v7x
topology: tpu7x:2x2x1
jax: 0.10.0
libtpu: 0.0.40
codegen_flags: <defaults>
</compile_context>

<pallas_src>
import functools

import jax
import jax.numpy as jnp
from jax.experimental import pallas as pl
from jax.experimental.pallas import tpu as pltpu


def _round_up(x, m):
    return ((x + m - 1) // m) * m


def _sigmoid(z):
    # Exact: sigmoid(z) = 0.5 * tanh(0.5*z) + 0.5  (single EUP tanh, no divide).
    return 0.5 * jnp.tanh(0.5 * z) + 0.5


def _mogrifier_lstm_kernel(
    x_ref, h_ref, c_ref,
    qw_ref, qb_ref, rw_ref, rb_ref,
    wcat_ref, bcat_ref,
    h_out_ref, c_out_ref,
    *, num_rounds, hidden_pad,
):
    f32 = jnp.float32
    x = x_ref[...].astype(f32)
    h = h_ref[...].astype(f32)
    c = c_ref[...].astype(f32)

    x_mod, h_mod = x, h
    # Mogrifier rounds -- statically unrolled (num_rounds is a trace-time const).
    for i in range(1, num_rounds + 1):
        if i % 2 == 1:
            q = i // 2
            z = jnp.dot(h_mod, qw_ref[q], preferred_element_type=f32) + qb_ref[q]
            x_mod = (2.0 * _sigmoid(z)) * x_mod
        else:
            r = i // 2 - 1
            z = jnp.dot(x_mod, rw_ref[r], preferred_element_type=f32) + rb_ref[r]
            h_mod = (2.0 * _sigmoid(z)) * h_mod

    # Fused LSTM gates: [x_mod | h_mod] @ W_cat + (b_ih + b_hh).
    # Columns were reordered at prep time to (i, f, o, g), each hidden_pad wide.
    xh = jnp.concatenate([x_mod, h_mod], axis=-1)
    gates = jnp.dot(xh, wcat_ref[...], preferred_element_type=f32) + bcat_ref[...]

    H = hidden_pad
    sig = _sigmoid(gates[:, :3 * H])      # one wide sigmoid: i, f, o
    g_g = jnp.tanh(gates[:, 3 * H:])      # one tanh: g
    i_g = sig[:, 0 * H:1 * H]
    f_g = sig[:, 1 * H:2 * H]
    o_g = sig[:, 2 * H:3 * H]

    c_next = f_g * c + i_g * g_g
    h_next = o_g * jnp.tanh(c_next)

    h_out_ref[...] = h_next.astype(h_out_ref.dtype)
    c_out_ref[...] = c_next.astype(c_out_ref.dtype)


def _const_spec(block_shape, index_map):
    """Constant-index weight BlockSpec: single-buffer it (no re-fetch ever)."""
    if hasattr(pl, "Buffered"):
        try:
            return pl.BlockSpec(block_shape, index_map, pipeline_mode=pl.Buffered(1))
        except TypeError:
            pass
    return pl.BlockSpec(block_shape, index_map)


def mogrifier_lstm_cell(x, states, params, *, num_rounds=5, block_b=None):
    """One MogrifierLSTMCell step.

    x: (B, input_size); states = (h, c), each (B, hidden_size).
    params (weights stored transposed so matmuls are `act @ W`):
      q_w: (n_q, hidden, input)   q_b: (n_q, input)
      r_w: (n_r, input, hidden)   r_b: (n_r, hidden)
      w_ih_t: (input, 4*hidden)   b_ih: (4*hidden,)
      w_hh_t: (hidden, 4*hidden)  b_hh: (4*hidden,)
    Returns (h_next, c_next).
    """
    h, c = states
    B, input_size = x.shape
    _, hidden_size = h.shape
    if h.shape != (B, hidden_size) or c.shape != (B, hidden_size):
        raise ValueError("h/c must be (B, hidden_size)")
    if num_rounds < 2:
        raise ValueError("this kernel path expects num_rounds >= 2")

    n_q = (num_rounds + 1) // 2
    n_r = num_rounds // 2
    H, I = hidden_size, input_size

    # ---- Parameter prep (done once, outside the kernel) -------------------
    # Pad feature dims to multiples of 128 (lane width): lane-dense vregs,
    # aligned concat offsets and aligned gate-column slices.
    I_pad = _round_up(I, 128)
    H_pad = _round_up(H, 128)
    f32 = jnp.float32

    q_w = jnp.pad(params["q_w"], ((0, 0), (0, H_pad - H), (0, I_pad - I)))
    q_b = jnp.pad(params["q_b"].reshape(n_q, 1, I), ((0, 0), (0, 0), (0, I_pad - I)))
    r_w = jnp.pad(params["r_w"], ((0, 0), (0, I_pad - I), (0, H_pad - H)))
    r_b = jnp.pad(params["r_b"].reshape(n_r, 1, H), ((0, 0), (0, 0), (0, H_pad - H)))

    def _reorder_pad_gates(w):
        # (..., 4H) in PyTorch order (i, f, g, o) -> (..., 4*H_pad) in (i, f, o, g),
        # each gate padded to H_pad so every gate slice lands on a 128 boundary.
        i_, f_, g_, o_ = jnp.split(w, 4, axis=-1)
        padw = lambda a: jnp.pad(a, [(0, 0)] * (a.ndim - 1) + [(0, H_pad - H)])
        return jnp.concatenate([padw(i_), padw(f_), padw(o_), padw(g_)], axis=-1)

    w_ih_p = jnp.pad(_reorder_pad_gates(params["w_ih_t"]), ((0, I_pad - I), (0, 0)))
    w_hh_p = jnp.pad(_reorder_pad_gates(params["w_hh_t"]), ((0, H_pad - H), (0, 0)))
    w_cat = jnp.concatenate([w_ih_p, w_hh_p], axis=0)                  # (I_pad+H_pad, 4*H_pad)
    b_cat = _reorder_pad_gates((params["b_ih"] + params["b_hh"]).reshape(1, 4 * H))

    # ---- Batch tiling ------------------------------------------------------
    if block_b is None:
        if B >= 16:
            # grid >= 2 so the "parallel" batch axis can shard across both TCs (v7x).
            block_b = min(_round_up(-(-B // 2), 8), 512)
        else:
            block_b = _round_up(B, 8)
    block_b = _round_up(block_b, 8)
    b_pad = _round_up(B, block_b)

    def _pad_act(a, cols):
        return jnp.pad(a.astype(f32), ((0, b_pad - B), (0, cols - a.shape[1])))

    x_p = _pad_act(x, I_pad)
    h_p = _pad_act(h, H_pad)
    c_p = _pad_act(c, H_pad)
    grid = (b_pad // block_b,)

    kernel = functools.partial(
        _mogrifier_lstm_kernel, num_rounds=num_rounds, hidden_pad=H_pad
    )

    # ---- VMEM budget -------------------------------------------------------
    itm = 4  # f32 compute
    weight_bytes = (
        n_q * (H_pad + 1) * I_pad
        + n_r * (I_pad + 1) * H_pad
        + (I_pad + H_pad + 1) * 4 * H_pad
    ) * itm                                        # single-buffered (Buffered(1))
    act_block_bytes = block_b * (I_pad + 4 * H_pad) * itm          # x,h,c,h_out,c_out blocks
    scratch_bytes = block_b * (I_pad + 8 * H_pad) * itm            # xh, gates, temps
    need = weight_bytes + 2 * act_block_bytes + scratch_bytes
    try:
        phys_vmem = int(pltpu.get_tpu_info().vmem_capacity_bytes)
    except Exception:
        phys_vmem = 64 * 1024 * 1024
    vmem_limit = int(min(max(4 << 20, 2 * need), int(0.9 * phys_vmem)))

    # ---- Cost estimate -----------------------------------------------------
    flops = 2 * b_pad * (
        n_q * H_pad * I_pad + n_r * I_pad * H_pad + (I_pad + H_pad) * 4 * H_pad
    )
    transcendentals = b_pad * (n_q * I_pad + n_r * H_pad + 5 * H_pad)
    in_bytes = sum(a.size * a.dtype.itemsize for a in
                   (x_p, h_p, c_p, q_w, q_b, r_w, r_b, w_cat, b_cat))
    out_bytes = 2 * b_pad * H_pad * itm

    batch2 = lambda i: (i, 0)
    const2 = lambda i: (0, 0)
    const3 = lambda i: (0, 0, 0)

    h_next, c_next = pl.pallas_call(
        kernel,
        out_shape=(
            jax.ShapeDtypeStruct((b_pad, H_pad), f32),
            jax.ShapeDtypeStruct((b_pad, H_pad), f32),
        ),
        grid_spec=pltpu.PrefetchScalarGridSpec(
            num_scalar_prefetch=0,
            grid=grid,
            in_specs=[
                pl.BlockSpec((block_b, I_pad), batch2),                       # x
                pl.BlockSpec((block_b, H_pad), batch2),                       # h
                pl.BlockSpec((block_b, H_pad), batch2),                       # c
                _const_spec((n_q, H_pad, I_pad), const3),                     # q_w
                _const_spec((n_q, 1, I_pad), const3),                         # q_b
                _const_spec((n_r, I_pad, H_pad), const3),                     # r_w
                _const_spec((n_r, 1, H_pad), const3),                         # r_b
                _const_spec((I_pad + H_pad, 4 * H_pad), const2),              # W_cat
                _const_spec((1, 4 * H_pad), const2),                          # b_cat
            ],
            out_specs=[
                pl.BlockSpec((block_b, H_pad), batch2),                       # h_next
                pl.BlockSpec((block_b, H_pad), batch2),                       # c_next
            ],
        ),
        compiler_params=pltpu.CompilerParams(
            dimension_semantics=("parallel",),
            vmem_limit_bytes=vmem_limit,
        ),
        cost_estimate=pl.CostEstimate(
            flops=flops,
            transcendentals=transcendentals,
            bytes_accessed=in_bytes + out_bytes,
        ),
    )(x_p, h_p, c_p, q_w, q_b, r_w, r_b, w_cat, b_cat)

    h_next = h_next[:B, :H].astype(h.dtype)
    c_next = c_next[:B, :H].astype(c.dtype)
    return h_next, c_next


def _mogrifier_lstm_reference(x, states, params, *, num_rounds=5):
    """Pure-JAX reference mirroring the PyTorch MogrifierLSTMCell forward."""
    h, c = states
    x_mod, h_mod = x, h
    for i in range(1, num_rounds + 1):
        if i % 2 == 1:
            q = i // 2
            x_mod = 2.0 * jax.nn.sigmoid(h_mod @ params["q_w"][q] + params["q_b"][q]) * x_mod
        else:
            r = i // 2 - 1
            h_mod = 2.0 * jax.nn.sigmoid(x_mod @ params["r_w"][r] + params["r_b"][r]) * h_mod
    gates = (x_mod @ params["w_ih_t"] + params["b_ih"]
             + h_mod @ params["w_hh_t"] + params["b_hh"])
    i_g, f_g, g_g, o_g = jnp.split(gates, 4, axis=-1)
    i_g = jax.nn.sigmoid(i_g)
    f_g = jax.nn.sigmoid(f_g)
    g_g = jnp.tanh(g_g)
    o_g = jax.nn.sigmoid(o_g)
    c_next = f_g * c + i_g * g_g
    h_next = o_g * jnp.tanh(c_next)
    return h_next, c_next


if __name__ == "__main__":
    key = jax.random.PRNGKey(0)
    B, INPUT, HIDDEN, ROUNDS = 2, 32, 32, 5
    n_q, n_r = (ROUNDS + 1) // 2, ROUNDS // 2

    keys = jax.random.split(key, 11)
    scale = 0.1
    x = jax.random.normal(keys[0], (B, INPUT), jnp.float32)
    h = jax.random.normal(keys[1], (B, HIDDEN), jnp.float32)
    c = jax.random.normal(keys[2], (B, HIDDEN), jnp.float32)
    params = dict(
        q_w=scale * jax.random.normal(keys[3], (n_q, HIDDEN, INPUT), jnp.float32),
        q_b=scale * jax.random.normal(keys[4], (n_q, INPUT), jnp.float32),
        r_w=scale * jax.random.normal(keys[5], (n_r, INPUT, HIDDEN), jnp.float32),
        r_b=scale * jax.random.normal(keys[6], (n_r, HIDDEN), jnp.float32),
        w_ih_t=scale * jax.random.normal(keys[7], (INPUT, 4 * HIDDEN), jnp.float32),
        b_ih=scale * jax.random.normal(keys[8], (4 * HIDDEN,), jnp.float32),
        w_hh_t=scale * jax.random.normal(keys[9], (HIDDEN, 4 * HIDDEN), jnp.float32),
        b_hh=scale * jax.random.normal(keys[10], (4 * HIDDEN,), jnp.float32),
    )

    h_next, c_next = mogrifier_lstm_cell(x, (h, c), params, num_rounds=ROUNDS)
    (h_next, c_next) = jax.block_until_ready((h_next, c_next))

    h_ref, c_ref = _mogrifier_lstm_reference(x, (h, c), params, num_rounds=ROUNDS)
    assert h_next.shape == (B, HIDDEN) and c_next.shape == (B, HIDDEN)
    assert jnp.allclose(h_next, h_ref, atol=1e-5, rtol=1e-5)
    assert jnp.allclose(c_next, c_ref, atol=1e-5, rtol=1e-5)

    print("KERNEL_OK")
</pallas_src>

<mosaic_0001>
module attributes {stable_mosaic.version = 11 : i64} {
  func.func @_mogrifier_lstm_kernel(%arg0: i32, %arg1: memref<8x128xf32, #tpu.memory_space<vmem>>, %arg2: memref<8x128xf32, #tpu.memory_space<vmem>>, %arg3: memref<8x128xf32, #tpu.memory_space<vmem>>, %arg4: memref<3x128x128xf32, #tpu.memory_space<vmem>>, %arg5: memref<3x1x128xf32, #tpu.memory_space<vmem>>, %arg6: memref<2x128x128xf32, #tpu.memory_space<vmem>>, %arg7: memref<2x1x128xf32, #tpu.memory_space<vmem>>, %arg8: memref<256x512xf32, #tpu.memory_space<vmem>>, %arg9: memref<1x512xf32, #tpu.memory_space<vmem>>, %arg10: memref<8x128xf32, #tpu.memory_space<vmem>>, %arg11: memref<8x128xf32, #tpu.memory_space<vmem>>) attributes {dimension_semantics = [#tpu.dimension_semantics<parallel>], iteration_bounds = array<i64: 1>, scalar_prefetch = 0 : i64, scratch_operands = 0 : i64, tpu.core_type = #tpu.core_type<tc>, window_params = [{transform_indices = @transform_0, window_bounds = array<i64: 8, 128>}, {transform_indices = @transform_1, window_bounds = array<i64: 8, 128>}, {transform_indices = @transform_2, window_bounds = array<i64: 8, 128>}, {pipeline_mode = #tpu.pipeline_mode<synchronous>, transform_indices = @transform_3, window_bounds = array<i64: 3, 128, 128>}, {pipeline_mode = #tpu.pipeline_mode<synchronous>, transform_indices = @transform_4, window_bounds = array<i64: 3, 1, 128>}, {pipeline_mode = #tpu.pipeline_mode<synchronous>, transform_indices = @transform_5, window_bounds = array<i64: 2, 128, 128>}, {pipeline_mode = #tpu.pipeline_mode<synchronous>, transform_indices = @transform_6, window_bounds = array<i64: 2, 1, 128>}, {pipeline_mode = #tpu.pipeline_mode<synchronous>, transform_indices = @transform_7, window_bounds = array<i64: 256, 512>}, {pipeline_mode = #tpu.pipeline_mode<synchronous>, transform_indices = @transform_8, window_bounds = array<i64: 1, 512>}, {transform_indices = @transform_9, window_bounds = array<i64: 8, 128>}, {transform_indices = @transform_10, window_bounds = array<i64: 8, 128>}]} {
    %c0 = arith.constant 0 : index
    %c0_0 = arith.constant 0 : index
    %0 = vector.load %arg1[%c0, %c0_0] : memref<8x128xf32, #tpu.memory_space<vmem>>, vector<8x128xf32>
    %c0_1 = arith.constant 0 : index
    %c0_2 = arith.constant 0 : index
    %1 = vector.load %arg2[%c0_1, %c0_2] : memref<8x128xf32, #tpu.memory_space<vmem>>, vector<8x128xf32>
    %c0_3 = arith.constant 0 : index
    %c0_4 = arith.constant 0 : index
    %2 = vector.load %arg3[%c0_3, %c0_4] : memref<8x128xf32, #tpu.memory_space<vmem>>, vector<8x128xf32>
    %c0_5 = arith.constant 0 : index
    %c0_6 = arith.constant 0 : index
    %c0_7 = arith.constant 0 : index
    %3 = vector.load %arg4[%c0_5, %c0_6, %c0_7] : memref<3x128x128xf32, #tpu.memory_space<vmem>>, vector<1x128x128xf32>
    %4 = vector.shape_cast %3 : vector<1x128x128xf32> to vector<128x128xf32>
    %cst = arith.constant dense<0.000000e+00> : vector<8x128xf32>
    %5 = tpu.matmul %1, %4, %cst {dimension_numbers = #tpu.dot_dimension_numbers<[1], [0], [0], [1], [0, 0, 1, 1], [], []>} : vector<8x128xf32>, vector<128x128xf32>, vector<8x128xf32> -> vector<8x128xf32>
    %c0_8 = arith.constant 0 : index
    %c0_9 = arith.constant 0 : index
    %c0_10 = arith.constant 0 : index
    %6 = vector.load %arg5[%c0_8, %c0_9, %c0_10] : memref<3x1x128xf32, #tpu.memory_space<vmem>>, vector<1x1x128xf32>
    %7 = vector.shape_cast %6 : vector<1x1x128xf32> to vector<1x128xf32>
    %8 = vector.broadcast %7 : vector<1x128xf32> to vector<8x128xf32>
    %9 = arith.addf %5, %8 : vector<8x128xf32>
    %cst_11 = arith.constant 5.000000e-01 : f32
    %10 = vector.broadcast %cst_11 : f32 to vector<8x128xf32>
    %11 = arith.mulf %10, %9 : vector<8x128xf32>
    %12 = math.tanh %11 : vector<8x128xf32>
    %cst_12 = arith.constant 5.000000e-01 : f32
    %13 = vector.broadcast %cst_12 : f32 to vector<8x128xf32>
    %14 = arith.mulf %13, %12 : vector<8x128xf32>
    %cst_13 = arith.constant 5.000000e-01 : f32
    %15 = vector.broadcast %cst_13 : f32 to vector<8x128xf32>
    %16 = arith.addf %14, %15 : vector<8x128xf32>
    %cst_14 = arith.constant 2.000000e+00 : f32
    %17 = vector.broadcast %cst_14 : f32 to vector<8x128xf32>
    %18 = arith.mulf %17, %16 : vector<8x128xf32>
    %19 = arith.mulf %18, %0 : vector<8x128xf32>
    %c0_15 = arith.constant 0 : index
    %c0_16 = arith.constant 0 : index
    %c0_17 = arith.constant 0 : index
    %20 = vector.load %arg6[%c0_15, %c0_16, %c0_17] : memref<2x128x128xf32, #tpu.memory_space<vmem>>, vector<1x128x128xf32>
    %21 = vector.shape_cast %20 : vector<1x128x128xf32> to vector<128x128xf32>
    %cst_18 = arith.constant dense<0.000000e+00> : vector<8x128xf32>
    %22 = tpu.matmul %19, %21, %cst_18 {dimension_numbers = #tpu.dot_dimension_numbers<[1], [0], [0], [1], [0, 0, 1, 1], [], []>} : vector<8x128xf32>, vector<128x128xf32>, vector<8x128xf32> -> vector<8x128xf32>
    %c0_19 = arith.constant 0 : index
    %c0_20 = arith.constant 0 : index
    %c0_21 = arith.constant 0 : index
    %23 = vector.load %arg7[%c0_19, %c0_20, %c0_21] : memref<2x1x128xf32, #tpu.memory_space<vmem>>, vector<1x1x128xf32>
    %24 = vector.shape_cast %23 : vector<1x1x128xf32> to vector<1x128xf32>
    %25 = vector.broadcast %24 : vector<1x128xf32> to vector<8x128xf32>
    %26 = arith.addf %22, %25 : vector<8x128xf32>
    %cst_22 = arith.constant 5.000000e-01 : f32
    %27 = vector.broadcast %cst_22 : f32 to vector<8x128xf32>
    %28 = arith.mulf %27, %26 : vector<8x128xf32>
    %29 = math.tanh %28 : vector<8x128xf32>
    %cst_23 = arith.constant 5.000000e-01 : f32
    %30 = vector.broadcast %cst_23 : f32 to vector<8x128xf32>
    %31 = arith.mulf %30, %29 : vector<8x128xf32>
    %cst_24 = arith.constant 5.000000e-01 : f32
    %32 = vector.broadcast %cst_24 : f32 to vector<8x128xf32>
    %33 = arith.addf %31, %32 : vector<8x128xf32>
    %cst_25 = arith.constant 2.000000e+00 : f32
    %34 = vector.broadcast %cst_25 : f32 to vector<8x128xf32>
    %35 = arith.mulf %34, %33 : vector<8x128xf32>
    %36 = arith.mulf %35, %1 : vector<8x128xf32>
    %c1 = arith.constant 1 : index
    %c0_26 = arith.constant 0 : index
    %c0_27 = arith.constant 0 : index
    %37 = vector.load %arg4[%c1, %c0_26, %c0_27] : memref<3x128x128xf32, #tpu.memory_space<vmem>>, vector<1x128x128xf32>
    %38 = vector.shape_cast %37 : vector<1x128x128xf32> to vector<128x128xf32>
    %cst_28 = arith.constant dense<0.000000e+00> : vector<8x128xf32>
    %39 = tpu.matmul %36, %38, %cst_28 {dimension_numbers = #tpu.dot_dimension_numbers<[1], [0], [0], [1], [0, 0, 1, 1], [], []>} : vector<8x128xf32>, vector<128x128xf32>, vector<8x128xf32> -> vector<8x128xf32>
    %c1_29 = arith.constant 1 : index
    %c0_30 = arith.constant 0 : index
    %c0_31 = arith.constant 0 : index
    %40 = vector.load %arg5[%c1_29, %c0_30, %c0_31] : memref<3x1x128xf32, #tpu.memory_space<vmem>>, vector<1x1x128xf32>
    %41 = vector.shape_cast %40 : vector<1x1x128xf32> to vector<1x128xf32>
    %42 = vector.broadcast %41 : vector<1x128xf32> to vector<8x128xf32>
    %43 = arith.addf %39, %42 : vector<8x128xf32>
    %cst_32 = arith.constant 5.000000e-01 : f32
    %44 = vector.broadcast %cst_32 : f32 to vector<8x128xf32>
    %45 = arith.mulf %44, %43 : vector<8x128xf32>
    %46 = math.tanh %45 : vector<8x128xf32>
    %cst_33 = arith.constant 5.000000e-01 : f32
    %47 = vector.broadcast %cst_33 : f32 to vector<8x128xf32>
    %48 = arith.mulf %47, %46 : vector<8x128xf32>
    %cst_34 = arith.constant 5.000000e-01 : f32
    %49 = vector.broadcast %cst_34 : f32 to vector<8x128xf32>
    %50 = arith.addf %48, %49 : vector<8x128xf32>
    %cst_35 = arith.constant 2.000000e+00 : f32
    %51 = vector.broadcast %cst_35 : f32 to vector<8x128xf32>
    %52 = arith.mulf %51, %50 : vector<8x128xf32>
    %53 = arith.mulf %52, %19 : vector<8x128xf32>
    %c1_36 = arith.constant 1 : index
    %c0_37 = arith.constant 0 : index
    %c0_38 = arith.constant 0 : index
    %54 = vector.load %arg6[%c1_36, %c0_37, %c0_38] : memref<2x128x128xf32, #tpu.memory_space<vmem>>, vector<1x128x128xf32>
    %55 = vector.shape_cast %54 : vector<1x128x128xf32> to vector<128x128xf32>
    %cst_39 = arith.constant dense<0.000000e+00> : vector<8x128xf32>
    %56 = tpu.matmul %53, %55, %cst_39 {dimension_numbers = #tpu.dot_dimension_numbers<[1], [0], [0], [1], [0, 0, 1, 1], [], []>} : vector<8x128xf32>, vector<128x128xf32>, vector<8x128xf32> -> vector<8x128xf32>
    %c1_40 = arith.constant 1 : index
    %c0_41 = arith.constant 0 : index
    %c0_42 = arith.constant 0 : index
    %57 = vector.load %arg7[%c1_40, %c0_41, %c0_42] : memref<2x1x128xf32, #tpu.memory_space<vmem>>, vector<1x1x128xf32>
    %58 = vector.shape_cast %57 : vector<1x1x128xf32> to vector<1x128xf32>
    %59 = vector.broadcast %58 : vector<1x128xf32> to vector<8x128xf32>
    %60 = arith.addf %56, %59 : vector<8x128xf32>
    %cst_43 = arith.constant 5.000000e-01 : f32
    %61 = vector.broadcast %cst_43 : f32 to vector<8x128xf32>
    %62 = arith.mulf %61, %60 : vector<8x128xf32>
    %63 = math.tanh %62 : vector<8x128xf32>
    %cst_44 = arith.constant 5.000000e-01 : f32
    %64 = vector.broadcast %cst_44 : f32 to vector<8x128xf32>
    %65 = arith.mulf %64, %63 : vector<8x128xf32>
    %cst_45 = arith.constant 5.000000e-01 : f32
    %66 = vector.broadcast %cst_45 : f32 to vector<8x128xf32>
    %67 = arith.addf %65, %66 : vector<8x128xf32>
    %cst_46 = arith.constant 2.000000e+00 : f32
    %68 = vector.broadcast %cst_46 : f32 to vector<8x128xf32>
    %69 = arith.mulf %68, %67 : vector<8x128xf32>
    %70 = arith.mulf %69, %36 : vector<8x128xf32>
    %c2 = arith.constant 2 : index
    %c0_47 = arith.constant 0 : index
    %c0_48 = arith.constant 0 : index
    %71 = vector.load %arg4[%c2, %c0_47, %c0_48] : memref<3x128x128xf32, #tpu.memory_space<vmem>>, vector<1x128x128xf32>
    %72 = vector.shape_cast %71 : vector<1x128x128xf32> to vector<128x128xf32>
    %cst_49 = arith.constant dense<0.000000e+00> : vector<8x128xf32>
    %73 = tpu.matmul %70, %72, %cst_49 {dimension_numbers = #tpu.dot_dimension_numbers<[1], [0], [0], [1], [0, 0, 1, 1], [], []>} : vector<8x128xf32>, vector<128x128xf32>, vector<8x128xf32> -> vector<8x128xf32>
    %c2_50 = arith.constant 2 : index
    %c0_51 = arith.constant 0 : index
    %c0_52 = arith.constant 0 : index
    %74 = vector.load %arg5[%c2_50, %c0_51, %c0_52] : memref<3x1x128xf32, #tpu.memory_space<vmem>>, vector<1x1x128xf32>
    %75 = vector.shape_cast %74 : vector<1x1x128xf32> to vector<1x128xf32>
    %76 = vector.broadcast %75 : vector<1x128xf32> to vector<8x128xf32>
    %77 = arith.addf %73, %76 : vector<8x128xf32>
    %cst_53 = arith.constant 5.000000e-01 : f32
    %78 = vector.broadcast %cst_53 : f32 to vector<8x128xf32>
    %79 = arith.mulf %78, %77 : vector<8x128xf32>
    %80 = math.tanh %79 : vector<8x128xf32>
    %cst_54 = arith.constant 5.000000e-01 : f32
    %81 = vector.broadcast %cst_54 : f32 to vector<8x128xf32>
    %82 = arith.mulf %81, %80 : vector<8x128xf32>
    %cst_55 = arith.constant 5.000000e-01 : f32
    %83 = vector.broadcast %cst_55 : f32 to vector<8x128xf32>
    %84 = arith.addf %82, %83 : vector<8x128xf32>
    %cst_56 = arith.constant 2.000000e+00 : f32
    %85 = vector.broadcast %cst_56 : f32 to vector<8x128xf32>
    %86 = arith.mulf %85, %84 : vector<8x128xf32>
    %87 = arith.mulf %86, %53 : vector<8x128xf32>
    %88 = tpu.concatenate %87, %70 in 1 : vector<8x128xf32>, vector<8x128xf32> -> vector<8x256xf32>
    %c0_57 = arith.constant 0 : index
    %c0_58 = arith.constant 0 : index
    %89 = vector.load %arg8[%c0_57, %c0_58] : memref<256x512xf32, #tpu.memory_space<vmem>>, vector<256x512xf32>
    %cst_59 = arith.constant dense<0.000000e+00> : vector<8x512xf32>
    %90 = tpu.matmul %88, %89, %cst_59 {dimension_numbers = #tpu.dot_dimension_numbers<[1], [0], [0], [1], [0, 0, 1, 1], [], []>} : vector<8x256xf32>, vector<256x512xf32>, vector<8x512xf32> -> vector<8x512xf32>
    %c0_60 = arith.constant 0 : index
    %c0_61 = arith.constant 0 : index
    %91 = vector.load %arg9[%c0_60, %c0_61] : memref<1x512xf32, #tpu.memory_space<vmem>>, vector<1x512xf32>
    %92 = vector.broadcast %91 : vector<1x512xf32> to vector<8x512xf32>
    %93 = arith.addf %90, %92 : vector<8x512xf32>
    %94 = vector.extract_strided_slice %93 {offsets = [0, 0], sizes = [8, 384], strides = [1, 1]} : vector<8x512xf32> to vector<8x384xf32>
    %cst_62 = arith.constant 5.000000e-01 : f32
    %95 = vector.broadcast %cst_62 : f32 to vector<8x384xf32>
    %96 = arith.mulf %95, %94 : vector<8x384xf32>
    %97 = math.tanh %96 : vector<8x384xf32>
    %cst_63 = arith.constant 5.000000e-01 : f32
    %98 = vector.broadcast %cst_63 : f32 to vector<8x384xf32>
    %99 = arith.mulf %98, %97 : vector<8x384xf32>
    %cst_64 = arith.constant 5.000000e-01 : f32
    %100 = vector.broadcast %cst_64 : f32 to vector<8x384xf32>
    %101 = arith.addf %99, %100 : vector<8x384xf32>
    %102 = vector.extract_strided_slice %93 {offsets = [0, 384], sizes = [8, 128], strides = [1, 1]} : vector<8x512xf32> to vector<8x128xf32>
    %103 = math.tanh %102 : vector<8x128xf32>
    %104 = vector.extract_strided_slice %101 {offsets = [0, 0], sizes = [8, 128], strides = [1, 1]} : vector<8x384xf32> to vector<8x128xf32>
    %105 = vector.extract_strided_slice %101 {offsets = [0, 128], sizes = [8, 128], strides = [1, 1]} : vector<8x384xf32> to vector<8x128xf32>
    %106 = vector.extract_strided_slice %101 {offsets = [0, 256], sizes = [8, 128], strides = [1, 1]} : vector<8x384xf32> to vector<8x128xf32>
    %107 = arith.mulf %105, %2 : vector<8x128xf32>
    %108 = arith.mulf %104, %103 : vector<8x128xf32>
    %109 = arith.addf %107, %108 : vector<8x128xf32>
    %110 = math.tanh %109 : vector<8x128xf32>
    %111 = arith.mulf %106, %110 : vector<8x128xf32>
    %c0_65 = arith.constant 0 : index
    %c0_66 = arith.constant 0 : index
    %112 = vector.load %arg10[%c0_65, %c0_66] : memref<8x128xf32, #tpu.memory_space<vmem>>, vector<8x128xf32>
    tpu.vector_store %arg10[%c0_65, %c0_66], %111 {strides = array<i32>} : memref<8x128xf32, #tpu.memory_space<vmem>>, vector<8x128xf32>,
    %c0_67 = arith.constant 0 : index
    %c0_68 = arith.constant 0 : index
    %113 = vector.load %arg11[%c0_67, %c0_68] : memref<8x128xf32, #tpu.memory_space<vmem>>, vector<8x128xf32>
    tpu.vector_store %arg11[%c0_67, %c0_68], %109 {strides = array<i32>} : memref<8x128xf32, #tpu.memory_space<vmem>>, vector<8x128xf32>,
    return
  }
  func.func @transform_0(%arg0: i32) -> (i32, i32) {
    %c0_i32 = arith.constant 0 : i32
    %c0_i32_0 = arith.constant 0 : i32
    return %arg0, %c0_i32 : i32, i32
  }
  func.func @transform_1(%arg0: i32) -> (i32, i32) {
    %c0_i32 = arith.constant 0 : i32
    %c0_i32_0 = arith.constant 0 : i32
    return %arg0, %c0_i32 : i32, i32
  }
  func.func @transform_2(%arg0: i32) -> (i32, i32) {
    %c0_i32 = arith.constant 0 : i32
    %c0_i32_0 = arith.constant 0 : i32
    return %arg0, %c0_i32 : i32, i32
  }
  func.func @transform_3(%arg0: i32) -> (i32, i32, i32) {
    %c0_i32 = arith.constant 0 : i32
    %c0_i32_0 = arith.constant 0 : i32
    %c0_i32_1 = arith.constant 0 : i32
    %c0_i32_2 = arith.constant 0 : i32
    return %c0_i32, %c0_i32_0, %c0_i32_1 : i32, i32, i32
  }
  func.func @transform_4(%arg0: i32) -> (i32, i32, i32) {
    %c0_i32 = arith.constant 0 : i32
    %c0_i32_0 = arith.constant 0 : i32
    %c0_i32_1 = arith.constant 0 : i32
    %c0_i32_2 = arith.constant 0 : i32
    return %c0_i32, %c0_i32_0, %c0_i32_1 : i32, i32, i32
  }
  func.func @transform_5(%arg0: i32) -> (i32, i32, i32) {
    %c0_i32 = arith.constant 0 : i32
    %c0_i32_0 = arith.constant 0 : i32
    %c0_i32_1 = arith.constant 0 : i32
    %c0_i32_2 = arith.constant 0 : i32
    return %c0_i32, %c0_i32_0, %c0_i32_1 : i32, i32, i32
  }
  func.func @transform_6(%arg0: i32) -> (i32, i32, i32) {
    %c0_i32 = arith.constant 0 : i32
    %c0_i32_0 = arith.constant 0 : i32
    %c0_i32_1 = arith.constant 0 : i32
    %c0_i32_2 = arith.constant 0 : i32
    return %c0_i32, %c0_i32_0, %c0_i32_1 : i32, i32, i32
  }
  func.func @transform_7(%arg0: i32) -> (i32, i32) {
    %c0_i32 = arith.constant 0 : i32
    %c0_i32_0 = arith.constant 0 : i32
    %c0_i32_1 = arith.constant 0 : i32
    return %c0_i32, %c0_i32_0 : i32, i32
  }
  func.func @transform_8(%arg0: i32) -> (i32, i32) {
    %c0_i32 = arith.constant 0 : i32
    %c0_i32_0 = arith.constant 0 : i32
    %c0_i32_1 = arith.constant 0 : i32
    return %c0_i32, %c0_i32_0 : i32, i32
  }
  func.func @transform_9(%arg0: i32) -> (i32, i32) {
    %c0_i32 = arith.constant 0 : i32
    %c0_i32_0 = arith.constant 0 : i32
    return %arg0, %c0_i32 : i32, i32
  }
  func.func @transform_10(%arg0: i32) -> (i32, i32) {
    %c0_i32 = arith.constant 0 : i32
    %c0_i32_0 = arith.constant 0 : i32
    return %arg0, %c0_i32 : i32, i32
  }
}

</mosaic_0001>

<llo_original>
// kernel: tpu_custom_call.1
$region0: #{tpu_custom_call.1}
  #allocation0 [shape = 'u32[]', space=smem, size = 0x4, offset = 0x4, fixed_abs, tag = 'smem constant byte address 0x4 - core index']
  #allocation1 [shape = 'u32[144,128]{1,0:T(1,128)}', space=vmem, size = 0x12000, scoped, tag = 'internal scratch']
  %s0 = inlined_call_operand.hbm [shape: f32[8,128], index: 0, kind: input, shape index: {}]
  %s1 = inlined_call_operand.hbm [shape: f32[8,128], index: 1, kind: input, shape index: {}]
  %s2 = inlined_call_operand.hbm [shape: f32[8,128], index: 2, kind: input, shape index: {}]
  %s3 = inlined_call_operand.hbm [shape: f32[3,128,128], index: 3, kind: input, shape index: {}]
  %s4 = inlined_call_operand.vmem [shape: f32[3,1,128], index: 4, kind: input, shape index: {}]
  %s5 = inlined_call_operand.hbm [shape: f32[2,128,128], index: 5, kind: input, shape index: {}]
  %s6 = inlined_call_operand.vmem [shape: f32[2,1,128], index: 6, kind: input, shape index: {}]
  %s7 = inlined_call_operand.hbm [shape: f32[256,512], index: 7, kind: input, shape index: {}]
  %s8 = inlined_call_operand.vmem [shape: f32[1,512], index: 8, kind: input, shape index: {}]
  %s9 = inlined_call_operand.hbm [shape: f32[8,128], index: 9, kind: output, shape index: {0}]
  %s10 = inlined_call_operand.hbm [shape: f32[8,128], index: 10, kind: output, shape index: {1}]
  %11 = xla_tuple %s9, %s10
  %s12 = sld [smem:[#allocation0]]
  $region78: #{tpu_custom_call.1} parent=0
    _
  %s14 = ssub.s32 1, %s12
  %s15 = scalar_select 0, %s14, %s12
  $region1: #{tpu_custom_call.1} parent=0
    #allocation2 [shape = 'u8[4096]{0}', space=vmem, size = 0x1000, scoped, tag = 'input window, operand 0, single buffered']
    #allocation3 [shape = 's32[1]{0}', space=sflag, size = 0x4, scoped, tag = 'scoped memory for tpu_custom_call.1']
    #allocation4 [shape = 's32[1]{0}', space=sflag, size = 0x4, scoped, tag = 'scoped memory for tpu_custom_call.1']
    #allocation5 [shape = 'u8[4096]{0}', space=vmem, size = 0x1000, scoped, tag = 'input window, operand 1, single buffered']
    #allocation6 [shape = 's32[1]{0}', space=sflag, size = 0x4, scoped, tag = 'scoped memory for tpu_custom_call.1']
    #allocation7 [shape = 'u8[4096]{0}', space=vmem, size = 0x1000, scoped, tag = 'input window, operand 2, single buffered']
    #allocation8 [shape = 'u8[196608]{0}', space=vmem, size = 0x30000, scoped, tag = 'input window, operand 3, single buffered']
    #allocation9 [shape = 's32[1]{0}', space=sflag, size = 0x4, scoped, tag = 'scoped memory for tpu_custom_call.1']
    #allocation10 [shape = 'u8[131072]{0}', space=vmem, size = 0x20000, scoped, tag = 'input window, operand 5, single buffered']
    #allocation11 [shape = 'u8[524288]{0}', space=vmem, size = 0x80000, scoped, tag = 'input window, operand 7, single buffered']
    #allocation12 [shape = 's32[1]{0}', space=sflag, size = 0x4, scoped, tag = 'scoped memory for tpu_custom_call.1']
    #allocation13 [shape = 'u8[4096]{0}', space=vmem, size = 0x1000, scoped, tag = 'output window, operand 0, single buffered']
    #allocation14 [shape = 'u8[4096]{0}', space=vmem, size = 0x1000, scoped, tag = 'output window, operand 1, single buffered']
    #allocation15 [shape = 's32[1]{0}', space=sflag, size = 0x4, scoped, tag = 'scoped memory for tpu_custom_call.1']
    %16 = vsyncpa [#allocation3], 0
    %17 = vsyncpa [#allocation6], 0
    %18 = vsyncpa [#allocation9], 0
    %19 = vsyncpa [#allocation12], 0
    %20 = vsyncpa [#allocation4], 0
    %21 = vsyncpa [#allocation15], 0
    // Predicated region
    $region2: #{tpu_custom_call.1} parent=1 // pred_check
      _
    $region3: #{tpu_custom_call.1} parent=1 // pred_check_branch
      %23 = sbr.rel (0) target = $region5
    $region4: #{tpu_custom_call.1} parent=1 // pred_region
      %s25 = ssub.s32 128, 128
      %26 = vsyncadd [#allocation3], %s25
      %s28 = sshll.u32 [#allocation2], 4
      %s29 = int_to_ptr.vmem [resolvable:$true] %s28
      %31 = dma.hbm_to_vmem [thread:$0]  %s0, 128, %s29, [#allocation3]
    $region5: #{tpu_custom_call.1} parent=1 // pred_fallthru
      _
    // Predicated region
    $region6: #{tpu_custom_call.1} parent=1 // pred_check
      _
    $region7: #{tpu_custom_call.1} parent=1 // pred_check_branch
      %33 = sbr.rel (0) target = $region9
    $region8: #{tpu_custom_call.1} parent=1 // pred_region
      %s35 = ssub.s32 128, 128
      %36 = vsyncadd [#allocation6], %s35
      %s38 = sshll.u32 [#allocation5], 4
      %s39 = int_to_ptr.vmem [resolvable:$true] %s38
      %41 = dma.hbm_to_vmem [thread:$0]  %s1, 128, %s39, [#allocation6]
    $region9: #{tpu_custom_call.1} parent=1 // pred_fallthru
      _
    // Predicated region
    $region10: #{tpu_custom_call.1} parent=1 // pred_check
      _
    $region11: #{tpu_custom_call.1} parent=1 // pred_check_branch
      %43 = sbr.rel (0) target = $region13
    $region12: #{tpu_custom_call.1} parent=1 // pred_region
      %s45 = ssub.s32 128, 128
      %46 = vsyncadd [#allocation6], %s45
      %s48 = sshll.u32 [#allocation7], 4
      %s49 = int_to_ptr.vmem [resolvable:$true] %s48
      %51 = dma.hbm_to_vmem [thread:$0]  %s2, 128, %s49, [#allocation6]
    $region13: #{tpu_custom_call.1} parent=1 // pred_fallthru
      _
    // Predicated region
    $region14: #{tpu_custom_call.1} parent=1 // pred_check
      _
    $region15: #{tpu_custom_call.1} parent=1 // pred_check_branch
      %53 = sbr.rel (0) target = $region17
    $region16: #{tpu_custom_call.1} parent=1 // pred_region
      %s55 = ssub.s32 6144, 6144
      %56 = vsyncadd [#allocation9], %s55
      %s57 = sshll.u32 [#allocation8], 4
      %s58 = int_to_ptr.vmem [resolvable:$true] %s57
      %63 = dma.hbm_to_vmem [thread:$0]  %s3, 6144, %s58, [#allocation9], 128, 128, 8
    $region17: #{tpu_custom_call.1} parent=1 // pred_fallthru
      _
    // Predicated region
    $region18: #{tpu_custom_call.1} parent=1 // pred_check
      _
    $region19: #{tpu_custom_call.1} parent=1 // pred_check_branch
      %65 = sbr.rel (0) target = $region21
    $region20: #{tpu_custom_call.1} parent=1 // pred_region
      _
    $region21: #{tpu_custom_call.1} parent=1 // pred_fallthru
      _
    // Predicated region
    $region22: #{tpu_custom_call.1} parent=1 // pred_check
      _
    $region23: #{tpu_custom_call.1} parent=1 // pred_check_branch
      %67 = sbr.rel (0) target = $region25
    $region24: #{tpu_custom_call.1} parent=1 // pred_region
      %s69 = ssub.s32 4096, 4096
      %70 = vsyncadd [#allocation9], %s69
      %s71 = sshll.u32 [#allocation10], 4
      %s72 = int_to_ptr.vmem [resolvable:$true] %s71
      %77 = dma.hbm_to_vmem [thread:$0]  %s5, 4096, %s72, [#allocation9], 128, 128, 8
    $region25: #{tpu_custom_call.1} parent=1 // pred_fallthru
      _
    // Predicated region
    $region26: #{tpu_custom_call.1} parent=1 // pred_check
      _
    $region27: #{tpu_custom_call.1} parent=1 // pred_check_branch
      %79 = sbr.rel (0) target = $region29
    $region28: #{tpu_custom_call.1} parent=1 // pred_region
      _
    $region29: #{tpu_custom_call.1} parent=1 // pred_fallthru
      _
    // Predicated region
    $region30: #{tpu_custom_call.1} parent=1 // pred_check
      _
    $region31: #{tpu_custom_call.1} parent=1 // pred_check_branch
      %81 = sbr.rel (0) target = $region33
    $region32: #{tpu_custom_call.1} parent=1 // pred_region
      %s83 = ssub.s32 16384, 16384
      %84 = vsyncadd [#allocation12], %s83
      %s85 = sshll.u32 [#allocation11], 4
      %s86 = int_to_ptr.vmem [resolvable:$true] %s85
      %91 = dma.hbm_to_vmem [thread:$0]  %s7, 16384, %s86, [#allocation12], 512, 512, 32
    $region33: #{tpu_custom_call.1} parent=1 // pred_fallthru
      _
    // Predicated region
    $region34: #{tpu_custom_call.1} parent=1 // pred_check
      _
    $region35: #{tpu_custom_call.1} parent=1 // pred_check_branch
      %93 = sbr.rel (0) target = $region37
    $region36: #{tpu_custom_call.1} parent=1 // pred_region
      _
    $region37: #{tpu_custom_call.1} parent=1 // pred_fallthru
      _
    // Predicated region
    $region38: #{tpu_custom_call.1} parent=1 // pred_check
      _
    $region39: #{tpu_custom_call.1} parent=1 // pred_check_branch
      %95 = sbr.rel (0) target = $region41
    $region40: #{tpu_custom_call.1} parent=1 // pred_region
      %96 = dma.done [#allocation3], 128
    $region41: #{tpu_custom_call.1} parent=1 // pred_fallthru
      _
    // Predicated region
    $region42: #{tpu_custom_call.1} parent=1 // pred_check
      _
    $region43: #{tpu_custom_call.1} parent=1 // pred_check_branch
      %98 = sbr.rel (0) target = $region45
    $region44: #{tpu_custom_call.1} parent=1 // pred_region
      %99 = dma.done [#allocation6], 128
    $region45: #{tpu_custom_call.1} parent=1 // pred_fallthru
      _
    // Predicated region
    $region46: #{tpu_custom_call.1} parent=1 // pred_check
      _
    $region47: #{tpu_custom_call.1} parent=1 // pred_check_branch
      %101 = sbr.rel (0) target = $region49
    $region48: #{tpu_custom_call.1} parent=1 // pred_region
      %102 = dma.done [#allocation6], 128
    $region49: #{tpu_custom_call.1} parent=1 // pred_fallthru
      _
    // Predicated region
    $region50: #{tpu_custom_call.1} parent=1 // pred_check
      _
    $region51: #{tpu_custom_call.1} parent=1 // pred_check_branch
      %104 = sbr.rel (0) target = $region53
    $region52: #{tpu_custom_call.1} parent=1 // pred_region
      %105 = dma.done [#allocation9], 6144
    $region53: #{tpu_custom_call.1} parent=1 // pred_fallthru
      _
    // Predicated region
    $region54: #{tpu_custom_call.1} parent=1 // pred_check
      _
    $region55: #{tpu_custom_call.1} parent=1 // pred_check_branch
      %107 = sbr.rel (0) target = $region57
    $region56: #{tpu_custom_call.1} parent=1 // pred_region
      %108 = dma.done [#allocation9], 4096
    $region57: #{tpu_custom_call.1} parent=1 // pred_fallthru
      _
    // Predicated region
    $region58: #{tpu_custom_call.1} parent=1 // pred_check
      _
    $region59: #{tpu_custom_call.1} parent=1 // pred_check_branch
      %110 = sbr.rel (0) target = $region61
    $region60: #{tpu_custom_call.1} parent=1 // pred_region
      %111 = dma.done [#allocation12], 16384
    $region61: #{tpu_custom_call.1} parent=1 // pred_fallthru
      _
    %v112 = vld [vmem:[#allocation2] sm:$0xff]
    %v113 = vld [vmem:[#allocation5] sm:$0xff]
    %v114 = vld [vmem:[#allocation7] sm:$0xff]
    %v115 = vld [vmem:[#allocation8] sm:$0xff]
    %v116 = vld [vmem:[#allocation8 + $0x8] sm:$0xff]
    %v117 = vld [vmem:[#allocation8 + $0x10] sm:$0xff]
    %v118 = vld [vmem:[#allocation8 + $0x18] sm:$0xff]
    %v119 = vld [vmem:[#allocation8 + $0x20] sm:$0xff]
    %v120 = vld [vmem:[#allocation8 + $0x28] sm:$0xff]
    %v121 = vld [vmem:[#allocation8 + $0x30] sm:$0xff]
    %v122 = vld [vmem:[#allocation8 + $0x38] sm:$0xff]
    %v123 = vld [vmem:[#allocation8 + $0x40] sm:$0xff]
    %v124 = vld [vmem:[#allocation8 + $0x48] sm:$0xff]
    %v125 = vld [vmem:[#allocation8 + $0x50] sm:$0xff]
    %v126 = vld [vmem:[#allocation8 + $0x58] sm:$0xff]
    %v127 = vld [vmem:[#allocation8 + $0x60] sm:$0xff]
    %v128 = vld [vmem:[#allocation8 + $0x68] sm:$0xff]
    %v129 = vld [vmem:[#allocation8 + $0x70] sm:$0xff]
    %v130 = vld [vmem:[#allocation8 + $0x78] sm:$0xff]
    %v131 = vld [vmem:[%s4] sm:$0x1]
    %v133 = vlaneseq
    %v134 = vshrl.u32 %v133, 7
    %v135 = vsub.s32 0, %v134
    %v136 = vrot.slane %v131, %v135
    %138 = vmatprep.subr.mxu0 0.0
    %139 = vmatpush1.msra.mxu0 %v115
    %140 = vmatprep.subr.mxu0 0.0
    %141 = vmatpush1.msra.mxu0 %v116
    %142 = vmatprep.subr.mxu0 0.0
    %143 = vmatpush1.msra.mxu0 %v117
    %144 = vmatprep.subr.mxu0 0.0
    %145 = vmatpush1.msra.mxu0 %v118
    %146 = vmatprep.subr.mxu0 0.0
    %147 = vmatpush1.msra.mxu0 %v119
    %148 = vmatprep.subr.mxu0 0.0
    %149 = vmatpush1.msra.mxu0 %v120
    %150 = vmatprep.subr.mxu0 0.0
    %151 = vmatpush1.msra.mxu0 %v121
    %152 = vmatprep.subr.mxu0 0.0
    %153 = vmatpush1.msra.mxu0 %v122
    %154 = vmatprep.subr.mxu0 0.0
    %155 = vmatpush1.msra.mxu0 %v123
    %156 = vmatprep.subr.mxu0 0.0
    %157 = vmatpush1.msra.mxu0 %v124
    %158 = vmatprep.subr.mxu0 0.0
    %159 = vmatpush1.msra.mxu0 %v125
    %160 = vmatprep.subr.mxu0 0.0
    %161 = vmatpush1.msra.mxu0 %v126
    %162 = vmatprep.subr.mxu0 0.0
    %163 = vmatpush1.msra.mxu0 %v127
    %164 = vmatprep.subr.mxu0 0.0
    %165 = vmatpush1.msra.mxu0 %v128
    %166 = vmatprep.subr.mxu0 0.0
    %167 = vmatpush1.msra.mxu0 %v129
    %168 = vmatprep.subr.mxu0 0.0
    %169 = vmatpush1.msra.mxu0 %v130
    %170 = vmatprep.subr.mxu0 0.0
    %171 = vmatpush1.msra.mxu0 0.0
    %172 = vmatprep.subr.mxu0 0.0
    %173 = vmatpush1.msra.mxu0 0.0
    %174 = vmatprep.subr.mxu0 0.0
    %175 = vmatpush1.msra.mxu0 0.0
    %176 = vmatprep.subr.mxu0 0.0
    %177 = vmatpush1.msra.mxu0 0.0
    %178 = vmatprep.subr.mxu0 0.0
    %179 = vmatpush1.msra.mxu0 0.0
    %180 = vmatprep.subr.mxu0 0.0
    %181 = vmatpush1.msra.mxu0 0.0
    %182 = vmatprep.subr.mxu0 0.0
    %183 = vmatpush1.msra.mxu0 0.0
    %184 = vmatprep.subr.mxu0 0.0
    %185 = vmatpush1.msra.mxu0 0.0
    %186 = vmatprep.subr.mxu0 0.0
    %187 = vmatpush1.msra.mxu0 0.0
    %188 = vmatprep.subr.mxu0 0.0
    %189 = vmatpush1.msra.mxu0 0.0
    %190 = vmatprep.subr.mxu0 0.0
    %191 = vmatpush1.msra.mxu0 0.0
    %192 = vmatprep.subr.mxu0 0.0
    %193 = vmatpush1.msra.mxu0 0.0
    %194 = vmatprep.subr.mxu0 0.0
    %195 = vmatpush1.msra.mxu0 0.0
    %196 = vmatprep.subr.mxu0 0.0
    %197 = vmatpush1.msra.mxu0 0.0
    %198 = vmatprep.subr.mxu0 0.0
    %199 = vmatpush1.msra.mxu0 0.0
    %200 = vmatprep.subr.mxu0 0.0
    %201 = vmatpush1.msra.mxu0 0.0
    %202 = vmatprep.mubr.f32.mxu0 0.0
    %203 = vmatmul.mubr.f32.gmra.mrb[0].mxu0 %v113
    %v204 = vpop.f32.mrb[0].mxu0
    %v205 = vadd.f32 %v136, %v204
    %v206 = vpop.f32.mrb[0].mxu0
    %207 = vdwg.mxu0
    %v208 = vmul.f32 %v205, 0.5
    %v209 = vtanh.pop %v208
    %v210 = vmul.f32 %v209, 0.5
    %v211 = vadd.f32 %v210, 0.5
    %v212 = vmul.f32 %v211, 2.0
    %v213 = vmul.f32 %v212, %v112
    %v214 = vld [vmem:[#allocation10] sm:$0xff]
    %v215 = vld [vmem:[#allocation10 + $0x8] sm:$0xff]
    %v216 = vld [vmem:[#allocation10 + $0x10] sm:$0xff]
    %v217 = vld [vmem:[#allocation10 + $0x18] sm:$0xff]
    %v218 = vld [vmem:[#allocation10 + $0x20] sm:$0xff]
    %v219 = vld [vmem:[#allocation10 + $0x28] sm:$0xff]
    %v220 = vld [vmem:[#allocation10 + $0x30] sm:$0xff]
    %v221 = vld [vmem:[#allocation10 + $0x38] sm:$0xff]
    %v222 = vld [vmem:[#allocation10 + $0x40] sm:$0xff]
    %v223 = vld [vmem:[#allocation10 + $0x48] sm:$0xff]
    %v224 = vld [vmem:[#allocation10 + $0x50] sm:$0xff]
    %v225 = vld [vmem:[#allocation10 + $0x58] sm:$0xff]
    %v226 = vld [vmem:[#allocation10 + $0x60] sm:$0xff]
    %v227 = vld [vmem:[#allocation10 + $0x68] sm:$0xff]
    %v228 = vld [vmem:[#allocation10 + $0x70] sm:$0xff]
    %v229 = vld [vmem:[#allocation10 + $0x78] sm:$0xff]
    %v230 = vld [vmem:[%s6] sm:$0x1]
    %v232 = vlaneseq
    %v233 = vshrl.u32 %v232, 7
    %v234 = vsub.s32 0, %v233
    %v235 = vrot.slane %v230, %v234
    %237 = vmatprep.subr.mxu0 0.0
    %238 = vmatpush1.msra.mxu0 %v214
    %239 = vmatprep.subr.mxu0 0.0
    %240 = vmatpush1.msra.mxu0 %v215
    %241 = vmatprep.subr.mxu0 0.0
    %242 = vmatpush1.msra.mxu0 %v216
    %243 = vmatprep.subr.mxu0 0.0
    %244 = vmatpush1.msra.mxu0 %v217
    %245 = vmatprep.subr.mxu0 0.0
    %246 = vmatpush1.msra.mxu0 %v218
    %247 = vmatprep.subr.mxu0 0.0
    %248 = vmatpush1.msra.mxu0 %v219
    %249 = vmatprep.subr.mxu0 0.0
    %250 = vmatpush1.msra.mxu0 %v220
    %251 = vmatprep.subr.mxu0 0.0
    %252 = vmatpush1.msra.mxu0 %v221
    %253 = vmatprep.subr.mxu0 0.0
    %254 = vmatpush1.msra.mxu0 %v222
    %255 = vmatprep.subr.mxu0 0.0
    %256 = vmatpush1.msra.mxu0 %v223
    %257 = vmatprep.subr.mxu0 0.0
    %258 = vmatpush1.msra.mxu0 %v224
    %259 = vmatprep.subr.mxu0 0.0
    %260 = vmatpush1.msra.mxu0 %v225
    %261 = vmatprep.subr.mxu0 0.0
    %262 = vmatpush1.msra.mxu0 %v226
    %263 = vmatprep.subr.mxu0 0.0
    %264 = vmatpush1.msra.mxu0 %v227
    %265 = vmatprep.subr.mxu0 0.0
    %266 = vmatpush1.msra.mxu0 %v228
    %267 = vmatprep.subr.mxu0 0.0
    %268 = vmatpush1.msra.mxu0 %v229
    %269 = vmatprep.subr.mxu0 0.0
    %270 = vmatpush1.msra.mxu0 0.0
    %271 = vmatprep.subr.mxu0 0.0
    %272 = vmatpush1.msra.mxu0 0.0
    %273 = vmatprep.subr.mxu0 0.0
    %274 = vmatpush1.msra.mxu0 0.0
    %275 = vmatprep.subr.mxu0 0.0
    %276 = vmatpush1.msra.mxu0 0.0
    %277 = vmatprep.subr.mxu0 0.0
    %278 = vmatpush1.msra.mxu0 0.0
    %279 = vmatprep.subr.mxu0 0.0
    %280 = vmatpush1.msra.mxu0 0.0
    %281 = vmatprep.subr.mxu0 0.0
    %282 = vmatpush1.msra.mxu0 0.0
    %283 = vmatprep.subr.mxu0 0.0
    %284 = vmatpush1.msra.mxu0 0.0
    %285 = vmatprep.subr.mxu0 0.0
    %286 = vmatpush1.msra.mxu0 0.0
    %287 = vmatprep.subr.mxu0 0.0
    %288 = vmatpush1.msra.mxu0 0.0
    %289 = vmatprep.subr.mxu0 0.0
    %290 = vmatpush1.msra.mxu0 0.0
    %291 = vmatprep.subr.mxu0 0.0
    %292 = vmatpush1.msra.mxu0 0.0
    %293 = vmatprep.subr.mxu0 0.0
    %294 = vmatpush1.msra.mxu0 0.0
    %295 = vmatprep.subr.mxu0 0.0
    %296 = vmatpush1.msra.mxu0 0.0
    %297 = vmatprep.subr.mxu0 0.0
    %298 = vmatpush1.msra.mxu0 0.0
    %299 = vmatprep.subr.mxu0 0.0
    %300 = vmatpush1.msra.mxu0 0.0
    %301 = vmatprep.mubr.f32.mxu0 0.0
    %302 = vmatmul.mubr.f32.gmra.mrb[0].mxu0 %v213
    %v303 = vpop.f32.mrb[0].mxu0
    %v304 = vadd.f32 %v235, %v303
    %v305 = vpop.f32.mrb[0].mxu0
    %306 = vdwg.mxu0
    %v307 = vmul.f32 %v304, 0.5
    %v308 = vtanh.pop %v307
    %v309 = vmul.f32 %v308, 0.5
    %v310 = vadd.f32 %v309, 0.5
    %v311 = vmul.f32 %v310, 2.0
    %v312 = vmul.f32 %v311, %v113
    %s313 = scalar_lea.vmem [#allocation8], 128
    %v314 = vld [vmem:[%s313] sm:$0xff]
    %v315 = vld [vmem:[%s313 + $0x8] sm:$0xff]
    %v316 = vld [vmem:[%s313 + $0x10] sm:$0xff]
    %v317 = vld [vmem:[%s313 + $0x18] sm:$0xff]
    %v318 = vld [vmem:[%s313 + $0x20] sm:$0xff]
    %v319 = vld [vmem:[%s313 + $0x28] sm:$0xff]
    %v320 = vld [vmem:[%s313 + $0x30] sm:$0xff]
    %v321 = vld [vmem:[%s313 + $0x38] sm:$0xff]
    %v322 = vld [vmem:[%s313 + $0x40] sm:$0xff]
    %v323 = vld [vmem:[%s313 + $0x48] sm:$0xff]
    %v324 = vld [vmem:[%s313 + $0x50] sm:$0xff]
    %v325 = vld [vmem:[%s313 + $0x58] sm:$0xff]
    %v326 = vld [vmem:[%s313 + $0x60] sm:$0xff]
    %v327 = vld [vmem:[%s313 + $0x68] sm:$0xff]
    %v328 = vld [vmem:[%s313 + $0x70] sm:$0xff]
    %v329 = vld [vmem:[%s313 + $0x78] sm:$0xff]
    %s330 = scalar_lea.vmem %s4, 1
    %v331 = vld [vmem:[%s330] sm:$0x1]
    %v333 = vlaneseq
    %v334 = vshrl.u32 %v333, 7
    %v335 = vsub.s32 0, %v334
    %v336 = vrot.slane %v331, %v335
    %338 = vmatprep.subr.mxu0 0.0
    %339 = vmatpush1.msra.mxu0 %v314
    %340 = vmatprep.subr.mxu0 0.0
    %341 = vmatpush1.msra.mxu0 %v315
    %342 = vmatprep.subr.mxu0 0.0
    %343 = vmatpush1.msra.mxu0 %v316
    %344 = vmatprep.subr.mxu0 0.0
    %345 = vmatpush1.msra.mxu0 %v317
    %346 = vmatprep.subr.mxu0 0.0
    %347 = vmatpush1.msra.mxu0 %v318
    %348 = vmatprep.subr.mxu0 0.0
    %349 = vmatpush1.msra.mxu0 %v319
    %350 = vmatprep.subr.mxu0 0.0
    %351 = vmatpush1.msra.mxu0 %v320
    %352 = vmatprep.subr.mxu0 0.0
    %353 = vmatpush1.msra.mxu0 %v321
    %354 = vmatprep.subr.mxu0 0.0
    %355 = vmatpush1.msra.mxu0 %v322
    %356 = vmatprep.subr.mxu0 0.0
    %357 = vmatpush1.msra.mxu0 %v323
    %358 = vmatprep.subr.mxu0 0.0
    %359 = vmatpush1.msra.mxu0 %v324
    %360 = vmatprep.subr.mxu0 0.0
    %361 = vmatpush1.msra.mxu0 %v325
    %362 = vmatprep.subr.mxu0 0.0
    %363 = vmatpush1.msra.mxu0 %v326
    %364 = vmatprep.subr.mxu0 0.0
    %365 = vmatpush1.msra.mxu0 %v327
    %366 = vmatprep.subr.mxu0 0.0
    %367 = vmatpush1.msra.mxu0 %v328
    %368 = vmatprep.subr.mxu0 0.0
    %369 = vmatpush1.msra.mxu0 %v329
    %370 = vmatprep.subr.mxu0 0.0
    %371 = vmatpush1.msra.mxu0 0.0
    %372 = vmatprep.subr.mxu0 0.0
    %373 = vmatpush1.msra.mxu0 0.0
    %374 = vmatprep.subr.mxu0 0.0
    %375 = vmatpush1.msra.mxu0 0.0
    %376 = vmatprep.subr.mxu0 0.0
    %377 = vmatpush1.msra.mxu0 0.0
    %378 = vmatprep.subr.mxu0 0.0
    %379 = vmatpush1.msra.mxu0 0.0
    %380 = vmatprep.subr.mxu0 0.0
    %381 = vmatpush1.msra.mxu0 0.0
    %382 = vmatprep.subr.mxu0 0.0
    %383 = vmatpush1.msra.mxu0 0.0
    %384 = vmatprep.subr.mxu0 0.0
    %385 = vmatpush1.msra.mxu0 0.0
    %386 = vmatprep.subr.mxu0 0.0
    %387 = vmatpush1.msra.mxu0 0.0
    %388 = vmatprep.subr.mxu0 0.0
    %389 = vmatpush1.msra.mxu0 0.0
    %390 = vmatprep.subr.mxu0 0.0
    %391 = vmatpush1.msra.mxu0 0.0
    %392 = vmatprep.subr.mxu0 0.0
    %393 = vmatpush1.msra.mxu0 0.0
    %394 = vmatprep.subr.mxu0 0.0
    %395 = vmatpush1.msra.mxu0 0.0
    %396 = vmatprep.subr.mxu0 0.0
    %397 = vmatpush1.msra.mxu0 0.0
    %398 = vmatprep.subr.mxu0 0.0
    %399 = vmatpush1.msra.mxu0 0.0
    %400 = vmatprep.subr.mxu0 0.0
    %401 = vmatpush1.msra.mxu0 0.0
    %402 = vmatprep.mubr.f32.mxu0 0.0
    %403 = vmatmul.mubr.f32.gmra.mrb[0].mxu0 %v312
    %v404 = vpop.f32.mrb[0].mxu0
    %v405 = vadd.f32 %v336, %v404
    %v406 = vpop.f32.mrb[0].mxu0
    %407 = vdwg.mxu0
    %v408 = vmul.f32 %v405, 0.5
    %v409 = vtanh.pop %v408
    %v410 = vmul.f32 %v409, 0.5
    %v411 = vadd.f32 %v410, 0.5
    %v412 = vmul.f32 %v411, 2.0
    %v413 = vmul.f32 %v412, %v213
    %s414 = scalar_lea.vmem [#allocation10], 128
    %v415 = vld [vmem:[%s414] sm:$0xff]
    %v416 = vld [vmem:[%s414 + $0x8] sm:$0xff]
    %v417 = vld [vmem:[%s414 + $0x10] sm:$0xff]
    %v418 = vld [vmem:[%s414 + $0x18] sm:$0xff]
    %v419 = vld [vmem:[%s414 + $0x20] sm:$0xff]
    %v420 = vld [vmem:[%s414 + $0x28] sm:$0xff]
    %v421 = vld [vmem:[%s414 + $0x30] sm:$0xff]
    %v422 = vld [vmem:[%s414 + $0x38] sm:$0xff]
    %v423 = vld [vmem:[%s414 + $0x40] sm:$0xff]
    %v424 = vld [vmem:[%s414 + $0x48] sm:$0xff]
    %v425 = vld [vmem:[%s414 + $0x50] sm:$0xff]
    %v426 = vld [vmem:[%s414 + $0x58] sm:$0xff]
    %v427 = vld [vmem:[%s414 + $0x60] sm:$0xff]
    %v428 = vld [vmem:[%s414 + $0x68] sm:$0xff]
    %v429 = vld [vmem:[%s414 + $0x70] sm:$0xff]
    %v430 = vld [vmem:[%s414 + $0x78] sm:$0xff]
    %s431 = scalar_lea.vmem %s6, 1
    %v432 = vld [vmem:[%s431] sm:$0x1]
    %v434 = vlaneseq
    %v435 = vshrl.u32 %v434, 7
    %v436 = vsub.s32 0, %v435
    %v437 = vrot.slane %v432, %v436
    %439 = vmatprep.subr.mxu0 0.0
    %440 = vmatpush1.msra.mxu0 %v415
    %441 = vmatprep.subr.mxu0 0.0
    %442 = vmatpush1.msra.mxu0 %v416
    %443 = vmatprep.subr.mxu0 0.0
    %444 = vmatpush1.msra.mxu0 %v417
    %445 = vmatprep.subr.mxu0 0.0
    %446 = vmatpush1.msra.mxu0 %v418
    %447 = vmatprep.subr.mxu0 0.0
    %448 = vmatpush1.msra.mxu0 %v419
    %449 = vmatprep.subr.mxu0 0.0
    %450 = vmatpush1.msra.mxu0 %v420
    %451 = vmatprep.subr.mxu0 0.0
    %452 = vmatpush1.msra.mxu0 %v421
    %453 = vmatprep.subr.mxu0 0.0
    %454 = vmatpush1.msra.mxu0 %v422
    %455 = vmatprep.subr.mxu0 0.0
    %456 = vmatpush1.msra.mxu0 %v423
    %457 = vmatprep.subr.mxu0 0.0
    %458 = vmatpush1.msra.mxu0 %v424
    %459 = vmatprep.subr.mxu0 0.0
    %460 = vmatpush1.msra.mxu0 %v425
    %461 = vmatprep.subr.mxu0 0.0
    %462 = vmatpush1.msra.mxu0 %v426
    %463 = vmatprep.subr.mxu0 0.0
    %464 = vmatpush1.msra.mxu0 %v427
    %465 = vmatprep.subr.mxu0 0.0
    %466 = vmatpush1.msra.mxu0 %v428
    %467 = vmatprep.subr.mxu0 0.0
    %468 = vmatpush1.msra.mxu0 %v429
    %469 = vmatprep.subr.mxu0 0.0
    %470 = vmatpush1.msra.mxu0 %v430
    %471 = vmatprep.subr.mxu0 0.0
    %472 = vmatpush1.msra.mxu0 0.0
    %473 = vmatprep.subr.mxu0 0.0
    %474 = vmatpush1.msra.mxu0 0.0
    %475 = vmatprep.subr.mxu0 0.0
    %476 = vmatpush1.msra.mxu0 0.0
    %477 = vmatprep.subr.mxu0 0.0
    %478 = vmatpush1.msra.mxu0 0.0
    %479 = vmatprep.subr.mxu0 0.0
    %480 = vmatpush1.msra.mxu0 0.0
    %481 = vmatprep.subr.mxu0 0.0
    %482 = vmatpush1.msra.mxu0 0.0
    %483 = vmatprep.subr.mxu0 0.0
    %484 = vmatpush1.msra.mxu0 0.0
    %485 = vmatprep.subr.mxu0 0.0
    %486 = vmatpush1.msra.mxu0 0.0
    %487 = vmatprep.subr.mxu0 0.0
    %488 = vmatpush1.msra.mxu0 0.0
    %489 = vmatprep.subr.mxu0 0.0
    %490 = vmatpush1.msra.mxu0 0.0
    %491 = vmatprep.subr.mxu0 0.0
    %492 = vmatpush1.msra.mxu0 0.0
    %493 = vmatprep.subr.mxu0 0.0
    %494 = vmatpush1.msra.mxu0 0.0
    %495 = vmatprep.subr.mxu0 0.0
    %496 = vmatpush1.msra.mxu0 0.0
    %497 = vmatprep.subr.mxu0 0.0
    %498 = vmatpush1.msra.mxu0 0.0
    %499 = vmatprep.subr.mxu0 0.0
    %500 = vmatpush1.msra.mxu0 0.0
    %501 = vmatprep.subr.mxu0 0.0
    %502 = vmatpush1.msra.mxu0 0.0
    %503 = vmatprep.mubr.f32.mxu0 0.0
    %504 = vmatmul.mubr.f32.gmra.mrb[0].mxu0 %v413
    %v505 = vpop.f32.mrb[0].mxu0
    %v506 = vadd.f32 %v437, %v505
    %v507 = vpop.f32.mrb[0].mxu0
    %508 = vdwg.mxu0
    %v509 = vmul.f32 %v506, 0.5
    %v510 = vtanh.pop %v509
    %v511 = vmul.f32 %v510, 0.5
    %v512 = vadd.f32 %v511, 0.5
    %v513 = vmul.f32 %v512, 2.0
    %v514 = vmul.f32 %v513, %v312
    %s515 = scalar_lea.vmem [#allocation8], 256
    %v516 = vld [vmem:[%s515] sm:$0xff]
    %v517 = vld [vmem:[%s515 + $0x8] sm:$0xff]
    %v518 = vld [vmem:[%s515 + $0x10] sm:$0xff]
    %v519 = vld [vmem:[%s515 + $0x18] sm:$0xff]
    %v520 = vld [vmem:[%s515 + $0x20] sm:$0xff]
    %v521 = vld [vmem:[%s515 + $0x28] sm:$0xff]
    %v522 = vld [vmem:[%s515 + $0x30] sm:$0xff]
    %v523 = vld [vmem:[%s515 + $0x38] sm:$0xff]
    %v524 = vld [vmem:[%s515 + $0x40] sm:$0xff]
    %v525 = vld [vmem:[%s515 + $0x48] sm:$0xff]
    %v526 = vld [vmem:[%s515 + $0x50] sm:$0xff]
    %v527 = vld [vmem:[%s515 + $0x58] sm:$0xff]
    %v528 = vld [vmem:[%s515 + $0x60] sm:$0xff]
    %v529 = vld [vmem:[%s515 + $0x68] sm:$0xff]
    %v530 = vld [vmem:[%s515 + $0x70] sm:$0xff]
    %v531 = vld [vmem:[%s515 + $0x78] sm:$0xff]
    %s532 = scalar_lea.vmem %s4, 2
    %v533 = vld [vmem:[%s532] sm:$0x1]
    %v535 = vlaneseq
    %v536 = vshrl.u32 %v535, 7
    %v537 = vsub.s32 0, %v536
    %v538 = vrot.slane %v533, %v537
    %540 = vmatprep.subr.mxu0 0.0
    %541 = vmatpush1.msra.mxu0 %v516
    %542 = vmatprep.subr.mxu0 0.0
    %543 = vmatpush1.msra.mxu0 %v517
    %544 = vmatprep.subr.mxu0 0.0
    %545 = vmatpush1.msra.mxu0 %v518
    %546 = vmatprep.subr.mxu0 0.0
    %547 = vmatpush1.msra.mxu0 %v519
    %548 = vmatprep.subr.mxu0 0.0
    %549 = vmatpush1.msra.mxu0 %v520
    %550 = vmatprep.subr.mxu0 0.0
    %551 = vmatpush1.msra.mxu0 %v521
    %552 = vmatprep.subr.mxu0 0.0
    %553 = vmatpush1.msra.mxu0 %v522
    %554 = vmatprep.subr.mxu0 0.0
    %555 = vmatpush1.msra.mxu0 %v523
    %556 = vmatprep.subr.mxu0 0.0
    %557 = vmatpush1.msra.mxu0 %v524
    %558 = vmatprep.subr.mxu0 0.0
    %559 = vmatpush1.msra.mxu0 %v525
    %560 = vmatprep.subr.mxu0 0.0
    %561 = vmatpush1.msra.mxu0 %v526
    %562 = vmatprep.subr.mxu0 0.0
    %563 = vmatpush1.msra.mxu0 %v527
    %564 = vmatprep.subr.mxu0 0.0
    %565 = vmatpush1.msra.mxu0 %v528
    %566 = vmatprep.subr.mxu0 0.0
    %567 = vmatpush1.msra.mxu0 %v529
    %568 = vmatprep.subr.mxu0 0.0
    %569 = vmatpush1.msra.mxu0 %v530
    %570 = vmatprep.subr.mxu0 0.0
    %571 = vmatpush1.msra.mxu0 %v531
    %572 = vmatprep.subr.mxu0 0.0
    %573 = vmatpush1.msra.mxu0 0.0
    %574 = vmatprep.subr.mxu0 0.0
    %575 = vmatpush1.msra.mxu0 0.0
    %576 = vmatprep.subr.mxu0 0.0
    %577 = vmatpush1.msra.mxu0 0.0
    %578 = vmatprep.subr.mxu0 0.0
    %579 = vmatpush1.msra.mxu0 0.0
    %580 = vmatprep.subr.mxu0 0.0
    %581 = vmatpush1.msra.mxu0 0.0
    %582 = vmatprep.subr.mxu0 0.0
    %583 = vmatpush1.msra.mxu0 0.0
    %584 = vmatprep.subr.mxu0 0.0
    %585 = vmatpush1.msra.mxu0 0.0
    %586 = vmatprep.subr.mxu0 0.0
    %587 = vmatpush1.msra.mxu0 0.0
    %588 = vmatprep.subr.mxu0 0.0
    %589 = vmatpush1.msra.mxu0 0.0
    %590 = vmatprep.subr.mxu0 0.0
    %591 = vmatpush1.msra.mxu0 0.0
    %592 = vmatprep.subr.mxu0 0.0
    %593 = vmatpush1.msra.mxu0 0.0
    %594 = vmatprep.subr.mxu0 0.0
    %595 = vmatpush1.msra.mxu0 0.0
    %596 = vmatprep.subr.mxu0 0.0
    %597 = vmatpush1.msra.mxu0 0.0
    %598 = vmatprep.subr.mxu0 0.0
    %599 = vmatpush1.msra.mxu0 0.0
    %600 = vmatprep.subr.mxu0 0.0
    %601 = vmatpush1.msra.mxu0 0.0
    %602 = vmatprep.subr.mxu0 0.0
    %603 = vmatpush1.msra.mxu0 0.0
    %604 = vmatprep.mubr.f32.mxu0 0.0
    %605 = vmatmul.mubr.f32.gmra.mrb[0].mxu0 %v514
    %v606 = vpop.f32.mrb[0].mxu0
    %v607 = vadd.f32 %v538, %v606
    %v608 = vpop.f32.mrb[0].mxu0
    %609 = vdwg.mxu0
    %v610 = vmul.f32 %v607, 0.5
    %v611 = vtanh.pop %v610
    %v612 = vmul.f32 %v611, 0.5
    %v613 = vadd.f32 %v612, 0.5
    %v614 = vmul.f32 %v613, 2.0
    %v615 = vmul.f32 %v614, %v413
    %v616 = vld [vmem:[#allocation11] sm:$0xff]
    %v617 = vld [vmem:[#allocation11 + $0x8] sm:$0xff]
    %v618 = vld [vmem:[#allocation11 + $0x10] sm:$0xff]
    %v619 = vld [vmem:[#allocation11 + $0x18] sm:$0xff]
    %v620 = vld [vmem:[#allocation11 + $0x20] sm:$0xff]
    %v621 = vld [vmem:[#allocation11 + $0x28] sm:$0xff]
    %v622 = vld [vmem:[#allocation11 + $0x30] sm:$0xff]
    %v623 = vld [vmem:[#allocation11 + $0x38] sm:$0xff]
    %v624 = vld [vmem:[#allocation11 + $0x40] sm:$0xff]
    %v625 = vld [vmem:[#allocation11 + $0x48] sm:$0xff]
    %v626 = vld [vmem:[#allocation11 + $0x50] sm:$0xff]
    %v627 = vld [vmem:[#allocation11 + $0x58] sm:$0xff]
    %v628 = vld [vmem:[#allocation11 + $0x60] sm:$0xff]
    %v629 = vld [vmem:[#allocation11 + $0x68] sm:$0xff]
    %v630 = vld [vmem:[#allocation11 + $0x70] sm:$0xff]
    %v631 = vld [vmem:[#allocation11 + $0x78] sm:$0xff]
    %v632 = vld [vmem:[#allocation11 + $0x80] sm:$0xff]
    %v633 = vld [vmem:[#allocation11 + $0x88] sm:$0xff]
    %v634 = vld [vmem:[#allocation11 + $0x90] sm:$0xff]
    %v635 = vld [vmem:[#allocation11 + $0x98] sm:$0xff]
    %v636 = vld [vmem:[#allocation11 + $0xa0] sm:$0xff]
    %v637 = vld [vmem:[#allocation11 + $0xa8] sm:$0xff]
    %v638 = vld [vmem:[#allocation11 + $0xb0] sm:$0xff]
    %v639 = vld [vmem:[#allocation11 + $0xb8] sm:$0xff]
    %v640 = vld [vmem:[#allocation11 + $0xc0] sm:$0xff]
    %v641 = vld [vmem:[#allocation11 + $0xc8] sm:$0xff]
    %v642 = vld [vmem:[#allocation11 + $0xd0] sm:$0xff]
    %v643 = vld [vmem:[#allocation11 + $0xd8] sm:$0xff]
    %v644 = vld [vmem:[#allocation11 + $0xe0] sm:$0xff]
    %v645 = vld [vmem:[#allocation11 + $0xe8] sm:$0xff]
    %v646 = vld [vmem:[#allocation11 + $0xf0] sm:$0xff]
    %v647 = vld [vmem:[#allocation11 + $0xf8] sm:$0xff]
    %v648 = vld [vmem:[#allocation11 + $0x100] sm:$0xff]
    %v649 = vld [vmem:[#allocation11 + $0x108] sm:$0xff]
    %v650 = vld [vmem:[#allocation11 + $0x110] sm:$0xff]
    %v651 = vld [vmem:[#allocation11 + $0x118] sm:$0xff]
    %v652 = vld [vmem:[#allocation11 + $0x120] sm:$0xff]
    %v653 = vld [vmem:[#allocation11 + $0x128] sm:$0xff]
    %v654 = vld [vmem:[#allocation11 + $0x130] sm:$0xff]
    %v655 = vld [vmem:[#allocation11 + $0x138] sm:$0xff]
    %v656 = vld [vmem:[#allocation11 + $0x140] sm:$0xff]
    %v657 = vld [vmem:[#allocation11 + $0x148] sm:$0xff]
    %v658 = vld [vmem:[#allocation11 + $0x150] sm:$0xff]
    %v659 = vld [vmem:[#allocation11 + $0x158] sm:$0xff]
    %v660 = vld [vmem:[#allocation11 + $0x160] sm:$0xff]
    %v661 = vld [vmem:[#allocation11 + $0x168] sm:$0xff]
    %v662 = vld [vmem:[#allocation11 + $0x170] sm:$0xff]
    %v663 = vld [vmem:[#allocation11 + $0x178] sm:$0xff]
    %v664 = vld [vmem:[#allocation11 + $0x180] sm:$0xff]
    %v665 = vld [vmem:[#allocation11 + $0x188] sm:$0xff]
    %v666 = vld [vmem:[#allocation11 + $0x190] sm:$0xff]
    %v667 = vld [vmem:[#allocation11 + $0x198] sm:$0xff]
    %v668 = vld [vmem:[#allocation11 + $0x1a0] sm:$0xff]
    %v669 = vld [vmem:[#allocation11 + $0x1a8] sm:$0xff]
    %v670 = vld [vmem:[#allocation11 + $0x1b0] sm:$0xff]
    %v671 = vld [vmem:[#allocation11 + $0x1b8] sm:$0xff]
    %v672 = vld [vmem:[#allocation11 + $0x1c0] sm:$0xff]
    %v673 = vld [vmem:[#allocation11 + $0x1c8] sm:$0xff]
    %v674 = vld [vmem:[#allocation11 + $0x1d0] sm:$0xff]
    %v675 = vld [vmem:[#allocation11 + $0x1d8] sm:$0xff]
    %v676 = vld [vmem:[#allocation11 + $0x1e0] sm:$0xff]
    %v677 = vld [vmem:[#allocation11 + $0x1e8] sm:$0xff]
    %v678 = vld [vmem:[#allocation11 + $0x1f0] sm:$0xff]
    %v679 = vld [vmem:[#allocation11 + $0x1f8] sm:$0xff]
    %v680 = vld [vmem:[#allocation11 + $0x200] sm:$0xff]
    %v681 = vld [vmem:[#allocation11 + $0x208] sm:$0xff]
    %v682 = vld [vmem:[#allocation11 + $0x210] sm:$0xff]
    %v683 = vld [vmem:[#allocation11 + $0x218] sm:$0xff]
    %v684 = vld [vmem:[#allocation11 + $0x220] sm:$0xff]
    %v685 = vld [vmem:[#allocation11 + $0x228] sm:$0xff]
    %v686 = vld [vmem:[#allocation11 + $0x230] sm:$0xff]
    %v687 = vld [vmem:[#allocation11 + $0x238] sm:$0xff]
    %v688 = vld [vmem:[#allocation11 + $0x240] sm:$0xff]
    %v689 = vld [vmem:[#allocation11 + $0x248] sm:$0xff]
    %v690 = vld [vmem:[#allocation11 + $0x250] sm:$0xff]
    %v691 = vld [vmem:[#allocation11 + $0x258] sm:$0xff]
    %v692 = vld [vmem:[#allocation11 + $0x260] sm:$0xff]
    %v693 = vld [vmem:[#allocation11 + $0x268] sm:$0xff]
    %v694 = vld [vmem:[#allocation11 + $0x270] sm:$0xff]
    %v695 = vld [vmem:[#allocation11 + $0x278] sm:$0xff]
    %v696 = vld [vmem:[#allocation11 + $0x280] sm:$0xff]
    %v697 = vld [vmem:[#allocation11 + $0x288] sm:$0xff]
    %v698 = vld [vmem:[#allocation11 + $0x290] sm:$0xff]
    %v699 = vld [vmem:[#allocation11 + $0x298] sm:$0xff]
    %v700 = vld [vmem:[#allocation11 + $0x2a0] sm:$0xff]
    %v701 = vld [vmem:[#allocation11 + $0x2a8] sm:$0xff]
    %v702 = vld [vmem:[#allocation11 + $0x2b0] sm:$0xff]
    %v703 = vld [vmem:[#allocation11 + $0x2b8] sm:$0xff]
    %v704 = vld [vmem:[#allocation11 + $0x2c0] sm:$0xff]
    %v705 = vld [vmem:[#allocation11 + $0x2c8] sm:$0xff]
    %v706 = vld [vmem:[#allocation11 + $0x2d0] sm:$0xff]
    %v707 = vld [vmem:[#allocation11 + $0x2d8] sm:$0xff]
    %v708 = vld [vmem:[#allocation11 + $0x2e0] sm:$0xff]
    %v709 = vld [vmem:[#allocation11 + $0x2e8] sm:$0xff]
    %v710 = vld [vmem:[#allocation11 + $0x2f0] sm:$0xff]
    %v711 = vld [vmem:[#allocation11 + $0x2f8] sm:$0xff]
    %v712 = vld [vmem:[#allocation11 + $0x300] sm:$0xff]
    %v713 = vld [vmem:[#allocation11 + $0x308] sm:$0xff]
    %v714 = vld [vmem:[#allocation11 + $0x310] sm:$0xff]
    %v715 = vld [vmem:[#allocation11 + $0x318] sm:$0xff]
    %v716 = vld [vmem:[#allocation11 + $0x320] sm:$0xff]
    %v717 = vld [vmem:[#allocation11 + $0x328] sm:$0xff]
    %v718 = vld [vmem:[#allocation11 + $0x330] sm:$0xff]
    %v719 = vld [vmem:[#allocation11 + $0x338] sm:$0xff]
    %v720 = vld [vmem:[#allocation11 + $0x340] sm:$0xff]
    %v721 = vld [vmem:[#allocation11 + $0x348] sm:$0xff]
    %v722 = vld [vmem:[#allocation11 + $0x350] sm:$0xff]
    %v723 = vld [vmem:[#allocation11 + $0x358] sm:$0xff]
    %v724 = vld [vmem:[#allocation11 + $0x360] sm:$0xff]
    %v725 = vld [vmem:[#allocation11 + $0x368] sm:$0xff]
    %v726 = vld [vmem:[#allocation11 + $0x370] sm:$0xff]
    %v727 = vld [vmem:[#allocation11 + $0x378] sm:$0xff]
    %v728 = vld [vmem:[#allocation11 + $0x380] sm:$0xff]
    %v729 = vld [vmem:[#allocation11 + $0x388] sm:$0xff]
    %v730 = vld [vmem:[#allocation11 + $0x390] sm:$0xff]
    %v731 = vld [vmem:[#allocation11 + $0x398] sm:$0xff]
    %v732 = vld [vmem:[#allocation11 + $0x3a0] sm:$0xff]
    %v733 = vld [vmem:[#allocation11 + $0x3a8] sm:$0xff]
    %v734 = vld [vmem:[#allocation11 + $0x3b0] sm:$0xff]
    %v735 = vld [vmem:[#allocation11 + $0x3b8] sm:$0xff]
    %v736 = vld [vmem:[#allocation11 + $0x3c0] sm:$0xff]
    %v737 = vld [vmem:[#allocation11 + $0x3c8] sm:$0xff]
    %v738 = vld [vmem:[#allocation11 + $0x3d0] sm:$0xff]
    %v739 = vld [vmem:[#allocation11 + $0x3d8] sm:$0xff]
    %v740 = vld [vmem:[#allocation11 + $0x3e0] sm:$0xff]
    %v741 = vld [vmem:[#allocation11 + $0x3e8] sm:$0xff]
    %v742 = vld [vmem:[#allocation11 + $0x3f0] sm:$0xff]
    %v743 = vld [vmem:[#allocation11 + $0x3f8] sm:$0xff]
    %v744 = vld [vmem:[%s8] sm:$0xf]
    %v746 = vlaneseq
    %v747 = vshrl.u32 %v746, 7
    %v748 = vsub.s32 0, %v747
    %v749 = vrot.slane %v744, %v748
    %v750 = vlaneseq
    %v751 = vshrl.u32 %v750, 7
    %v752 = vsub.s32 1, %v751
    %v753 = vrot.slane %v744, %v752
    %v754 = vlaneseq
    %v755 = vshrl.u32 %v754, 7
    %v756 = vsub.s32 2, %v755
    %v757 = vrot.slane %v744, %v756
    %v758 = vlaneseq
    %v759 = vshrl.u32 %v758, 7
    %v760 = vsub.s32 3, %v759
    %v761 = vrot.slane %v744, %v760
    %766 = vmatprep.subr.mxu0 %v617
    %767 = vmatpush1.msra.mxu0 %v616
    %768 = vmatprep.subr.mxu0 %v621
    %769 = vmatpush1.msra.mxu0 %v620
    %770 = vmatprep.subr.mxu0 %v625
    %771 = vmatpush1.msra.mxu0 %v624
    %772 = vmatprep.subr.mxu0 %v629
    %773 = vmatpush1.msra.mxu0 %v628
    %774 = vmatprep.subr.mxu0 %v633
    %775 = vmatpush1.msra.mxu0 %v632
    %776 = vmatprep.subr.mxu0 %v637
    %777 = vmatpush1.msra.mxu0 %v636
    %778 = vmatprep.subr.mxu0 %v641
    %779 = vmatpush1.msra.mxu0 %v640
    %780 = vmatprep.subr.mxu0 %v645
    %781 = vmatpush1.msra.mxu0 %v644
    %782 = vmatprep.subr.mxu0 %v649
    %783 = vmatpush1.msra.mxu0 %v648
    %784 = vmatprep.subr.mxu0 %v653
    %785 = vmatpush1.msra.mxu0 %v652
    %786 = vmatprep.subr.mxu0 %v657
    %787 = vmatpush1.msra.mxu0 %v656
    %788 = vmatprep.subr.mxu0 %v661
    %789 = vmatpush1.msra.mxu0 %v660
    %790 = vmatprep.subr.mxu0 %v665
    %791 = vmatpush1.msra.mxu0 %v664
    %792 = vmatprep.subr.mxu0 %v669
    %793 = vmatpush1.msra.mxu0 %v668
    %794 = vmatprep.subr.mxu0 %v673
    %795 = vmatpush1.msra.mxu0 %v672
    %796 = vmatprep.subr.mxu0 %v677
    %797 = vmatpush1.msra.mxu0 %v676
    %798 = vmatprep.subr.mxu0 %v681
    %799 = vmatpush1.msra.mxu0 %v680
    %800 = vmatprep.subr.mxu0 %v685
    %801 = vmatpush1.msra.mxu0 %v684
    %802 = vmatprep.subr.mxu0 %v689
    %803 = vmatpush1.msra.mxu0 %v688
    %804 = vmatprep.subr.mxu0 %v693
    %805 = vmatpush1.msra.mxu0 %v692
    %806 = vmatprep.subr.mxu0 %v697
    %807 = vmatpush1.msra.mxu0 %v696
    %808 = vmatprep.subr.mxu0 %v701
    %809 = vmatpush1.msra.mxu0 %v700
    %810 = vmatprep.subr.mxu0 %v705
    %811 = vmatpush1.msra.mxu0 %v704
    %812 = vmatprep.subr.mxu0 %v709
    %813 = vmatpush1.msra.mxu0 %v708
    %814 = vmatprep.subr.mxu0 %v713
    %815 = vmatpush1.msra.mxu0 %v712
    %816 = vmatprep.subr.mxu0 %v717
    %817 = vmatpush1.msra.mxu0 %v716
    %818 = vmatprep.subr.mxu0 %v721
    %819 = vmatpush1.msra.mxu0 %v720
    %820 = vmatprep.subr.mxu0 %v725
    %821 = vmatpush1.msra.mxu0 %v724
    %822 = vmatprep.subr.mxu0 %v729
    %823 = vmatpush1.msra.mxu0 %v728
    %824 = vmatprep.subr.mxu0 %v733
    %825 = vmatpush1.msra.mxu0 %v732
    %826 = vmatprep.subr.mxu0 %v737
    %827 = vmatpush1.msra.mxu0 %v736
    %828 = vmatprep.subr.mxu0 %v741
    %829 = vmatpush1.msra.mxu0 %v740
    %830 = vmatprep.mubr.f32.mxu0 %v514
    %831 = vmatmul.mubr.f32.gmra.mrb[0].mxu0 %v615
    %v832 = vpop.f32.mrb[0].mxu0
    %v833 = vadd.f32 %v749, %v832
    %v834 = vpop.f32.mrb[0].mxu0
    %v835 = vadd.f32 %v753, %v834
    %836 = vdwg.mxu0
    %837 = vmatprep.subr.mxu0 %v619
    %838 = vmatpush1.msra.mxu0 %v618
    %839 = vmatprep.subr.mxu0 %v623
    %840 = vmatpush1.msra.mxu0 %v622
    %841 = vmatprep.subr.mxu0 %v627
    %842 = vmatpush1.msra.mxu0 %v626
    %843 = vmatprep.subr.mxu0 %v631
    %844 = vmatpush1.msra.mxu0 %v630
    %845 = vmatprep.subr.mxu0 %v635
    %846 = vmatpush1.msra.mxu0 %v634
    %847 = vmatprep.subr.mxu0 %v639
    %848 = vmatpush1.msra.mxu0 %v638
    %849 = vmatprep.subr.mxu0 %v643
    %850 = vmatpush1.msra.mxu0 %v642
    %851 = vmatprep.subr.mxu0 %v647
    %852 = vmatpush1.msra.mxu0 %v646
    %853 = vmatprep.subr.mxu0 %v651
    %854 = vmatpush1.msra.mxu0 %v650
    %855 = vmatprep.subr.mxu0 %v655
    %856 = vmatpush1.msra.mxu0 %v654
    %857 = vmatprep.subr.mxu0 %v659
    %858 = vmatpush1.msra.mxu0 %v658
    %859 = vmatprep.subr.mxu0 %v663
    %860 = vmatpush1.msra.mxu0 %v662
    %861 = vmatprep.subr.mxu0 %v667
    %862 = vmatpush1.msra.mxu0 %v666
    %863 = vmatprep.subr.mxu0 %v671
    %864 = vmatpush1.msra.mxu0 %v670
    %865 = vmatprep.subr.mxu0 %v675
    %866 = vmatpush1.msra.mxu0 %v674
    %867 = vmatprep.subr.mxu0 %v679
    %868 = vmatpush1.msra.mxu0 %v678
    %869 = vmatprep.subr.mxu0 %v683
    %870 = vmatpush1.msra.mxu0 %v682
    %871 = vmatprep.subr.mxu0 %v687
    %872 = vmatpush1.msra.mxu0 %v686
    %873 = vmatprep.subr.mxu0 %v691
    %874 = vmatpush1.msra.mxu0 %v690
    %875 = vmatprep.subr.mxu0 %v695
    %876 = vmatpush1.msra.mxu0 %v694
    %877 = vmatprep.subr.mxu0 %v699
    %878 = vmatpush1.msra.mxu0 %v698
    %879 = vmatprep.subr.mxu0 %v703
    %880 = vmatpush1.msra.mxu0 %v702
    %881 = vmatprep.subr.mxu0 %v707
    %882 = vmatpush1.msra.mxu0 %v706
    %883 = vmatprep.subr.mxu0 %v711
    %884 = vmatpush1.msra.mxu0 %v710
    %885 = vmatprep.subr.mxu0 %v715
    %886 = vmatpush1.msra.mxu0 %v714
    %887 = vmatprep.subr.mxu0 %v719
    %888 = vmatpush1.msra.mxu0 %v718
    %889 = vmatprep.subr.mxu0 %v723
    %890 = vmatpush1.msra.mxu0 %v722
    %891 = vmatprep.subr.mxu0 %v727
    %892 = vmatpush1.msra.mxu0 %v726
    %893 = vmatprep.subr.mxu0 %v731
    %894 = vmatpush1.msra.mxu0 %v730
    %895 = vmatprep.subr.mxu0 %v735
    %896 = vmatpush1.msra.mxu0 %v734
    %897 = vmatprep.subr.mxu0 %v739
    %898 = vmatpush1.msra.mxu0 %v738
    %899 = vmatprep.subr.mxu0 %v743
    %900 = vmatpush1.msra.mxu0 %v742
    %901 = vmatprep.mubr.f32.mxu0 %v514
    %902 = vmatmul.mubr.f32.gmra.mrb[0].mxu0 %v615
    %v903 = vpop.f32.mrb[0].mxu0
    %v904 = vadd.f32 %v757, %v903
    %v905 = vpop.f32.mrb[0].mxu0
    %v906 = vadd.f32 %v761, %v905
    %907 = vdwg.mxu0
    %v908 = vmul.f32 %v833, 0.5
    %v909 = vmul.f32 %v835, 0.5
    %v910 = vmul.f32 %v904, 0.5
    %v911 = vtanh.pop %v908
    %v912 = vtanh.pop %v909
    %v913 = vtanh.pop %v910
    %v914 = vmul.f32 %v911, 0.5
    %v915 = vmul.f32 %v912, 0.5
    %v916 = vmul.f32 %v913, 0.5
    %v917 = vadd.f32 %v914, 0.5
    %v918 = vadd.f32 %v915, 0.5
    %v919 = vadd.f32 %v916, 0.5
    %v920 = vtanh.pop %v906
    %v921 = vmul.f32 %v918, %v114
    %v922 = vmul.f32 %v917, %v920
    %v923 = vadd.f32 %v921, %v922
    %v924 = vtanh.pop %v923
    %v925 = vmul.f32 %v919, %v924
    %926 = vst [vmem:[#allocation13] sm:$0xff] %v925
    %927 = vst [vmem:[#allocation14] sm:$0xff] %v923
    // Predicated region
    $region62: #{tpu_custom_call.1} parent=1 // pred_check
      _
    $region63: #{tpu_custom_call.1} parent=1 // pred_check_branch
      %929 = sbr.rel (0) target = $region65
    $region64: #{tpu_custom_call.1} parent=1 // pred_region
      %s931 = ssub.s32 128, 128
      %932 = vsyncadd [#allocation4], %s931
      %s934 = sshll.u32 [#allocation13], 4
      %s935 = int_to_ptr.vmem [resolvable:$true] %s934
      %937 = dma.vmem_to_hbm [thread:$0]  %s935, 128, %s9, [#allocation4]
    $region65: #{tpu_custom_call.1} parent=1 // pred_fallthru
      _
    // Predicated region
    $region66: #{tpu_custom_call.1} parent=1 // pred_check
      _
    $region67: #{tpu_custom_call.1} parent=1 // pred_check_branch
      %939 = sbr.rel (0) target = $region69
    $region68: #{tpu_custom_call.1} parent=1 // pred_region
      %s941 = ssub.s32 128, 128
      %942 = vsyncadd [#allocation15], %s941
      %s944 = sshll.u32 [#allocation14], 4
      %s945 = int_to_ptr.vmem [resolvable:$true] %s944
      %947 = dma.vmem_to_hbm [thread:$0]  %s945, 128, %s10, [#allocation15]
    $region69: #{tpu_custom_call.1} parent=1 // pred_fallthru
      _
    // Predicated region
    $region70: #{tpu_custom_call.1} parent=1 // pred_check
      _
    $region71: #{tpu_custom_call.1} parent=1 // pred_check_branch
      %949 = sbr.rel (0) target = $region73
    $region72: #{tpu_custom_call.1} parent=1 // pred_region
      %950 = dma.done [#allocation4], 128
    $region73: #{tpu_custom_call.1} parent=1 // pred_fallthru
      _
    // Predicated region
    $region74: #{tpu_custom_call.1} parent=1 // pred_check
      _
    $region75: #{tpu_custom_call.1} parent=1 // pred_check_branch
      %952 = sbr.rel (0) target = $region77
    $region76: #{tpu_custom_call.1} parent=1 // pred_region
      %953 = dma.done [#allocation15], 128
    $region77: #{tpu_custom_call.1} parent=1 // pred_fallthru
      _
    %954 = vsyncpa [#allocation3], 1
    %955 = vsyncpa [#allocation6], 1
    %956 = vsyncpa [#allocation9], 1
    %957 = vsyncpa [#allocation12], 1
    %958 = vsyncpa [#allocation4], 1
    %959 = vsyncpa [#allocation15], 1

</llo_original>
